<compile_context>
chip_gen: v7x
topology: tpu7x:2x2x1
jax: 0.10.0
libtpu: 0.0.40
codegen_flags: <defaults>
</compile_context>

<pallas_src>
import functools

import jax
import jax.numpy as jnp
from jax.experimental import pallas as pl
from jax.experimental.pallas import tpu as pltpu

LN_EPS = 1e-5  # nn.LayerNorm default


def _round_up(a, m):
    return ((a + m - 1) // m) * m


def _choose_tiling(M, tm_target):
    """Pick (tm, M_pad) for the 1-D row grid.

    Preferences (in order):
      * tm divides M exactly -> no pad copy of the patch matrix and no
        post-kernel [:M] slice copy (each is an extra HBM pass);
      * tm is a multiple of 8 (sublane-aligned blocks);
      * >= 2 grid steps when M allows it, so the "parallel" axis can shard
        across both TensorCores on v7x;
      * tm close to tm_target to amortize the ~0.35 us per-grid-step overhead.
    """
    tm_target = max(8, (tm_target // 8) * 8)
    if M >= 16:
        upper = max(8, min(tm_target, (M // 2 // 8) * 8))
    else:
        upper = max(8, min(tm_target, _round_up(M, 8)))
    lower = max(8, upper // 4)
    t = upper
    while t >= lower:                      # exact, aligned divisor near target
        if M % t == 0:
            return t, M
        t -= 8
    if M % 8 == 0 and M <= tm_target:      # single exact tile, no padding
        return M, M
    if M >= 16:                            # pad, but keep >= 2 steps (v7x)
        tm = min(tm_target, _round_up((M + 1) // 2, 8))
    else:
        tm = min(tm_target, _round_up(M, 8))
    return tm, _round_up(M, tm)


def _patch_embed_kernel(p_ref, w_ref, params_ref, o_ref):
    # p_ref:      (tm, K)   bf16/f32 patch rows
    # w_ref:      (K, E)    bf16/f32 projection weight (constant across grid)
    # params_ref: (8, E)    f32; row0=bias, row1=gamma, row2=beta
    # o_ref:      (tm, E)
    x = jnp.dot(p_ref[...], w_ref[...], preferred_element_type=jnp.float32)

    params = params_ref[...]
    bias = params[0:1, :]
    gamma = params[1:2, :]
    beta = params[2:3, :]

    x = x + bias  # bias participates in LN statistics (matches torch)

    # LayerNorm over the full (unpadded) embed dim; biased variance; f32 stats.
    mean = jnp.mean(x, axis=-1, keepdims=True)
    xc = x - mean
    var = jnp.mean(xc * xc, axis=-1, keepdims=True)
    y = xc * jax.lax.rsqrt(var + LN_EPS) * gamma + beta

    o_ref[...] = y.astype(o_ref.dtype)


@functools.partial(
    jax.jit,
    static_argnames=("patch_size", "compute_dtype", "out_dtype", "tm_target"))
def _patch_embed_impl(x, w, b, gamma, beta, *, patch_size, compute_dtype,
                      out_dtype, tm_target):
    B, C, H, W = x.shape
    E = w.shape[0]
    ph, pw = patch_size
    assert H % ph == 0 and W % pw == 0, "img_size must be divisible by patch_size"
    Hp, Wp = H // ph, W // pw
    N = Hp * Wp
    K = C * ph * pw
    M = B * N

    # ---- patch extraction (cast first so any materialized copy is half-width).
    # With allow_input_fusion below XLA may fuse this chain into the kernel's
    # input DMA so the (M, K) patch matrix never hits HBM.
    xp = x.astype(compute_dtype).reshape(B, C, Hp, ph, Wp, pw)
    xp = jnp.transpose(xp, (0, 2, 4, 1, 3, 5)).reshape(M, K)

    # conv weight (E, C, ph, pw) -> (K, E) so that patches @ wmat == conv
    wmat = w.reshape(E, K).T.astype(compute_dtype)

    # bias / gamma / beta packed into one (8, E) f32 operand (one DMA / buffer)
    params = jnp.stack([b, gamma, beta], axis=0).astype(jnp.float32)  # (3, E)
    params = jnp.pad(params, ((0, 5), (0, 0)))                        # (8, E)

    # ---- row tiling (prefer exact divisors of M; see _choose_tiling)
    tm, M_pad = _choose_tiling(M, tm_target)
    if M_pad != M:
        xp = jnp.pad(xp, ((0, M_pad - M), (0, 0)))
    grid = (M_pad // tm,)

    # ---- VMEM budget (cap below physical: v7x only has 64 MiB per TC)
    in_bytes = jnp.dtype(compute_dtype).itemsize
    out_bytes = jnp.dtype(out_dtype).itemsize
    vmem_est = (2 * tm * K * in_bytes        # double-buffered patch tiles
                + 2 * tm * E * out_bytes     # double-buffered output tiles
                + 2 * K * E * in_bytes       # weight (constant index map)
                + 2 * 8 * E * 4              # params
                + 4 * tm * E * 4)            # f32 intermediates (x, xc, y, stats)
    try:
        phys_vmem = pltpu.get_tpu_info().vmem_capacity_bytes
    except Exception:
        phys_vmem = 64 * 1024 * 1024         # v7x per-TC floor
    vmem_limit = int(min((phys_vmem * 3) // 4,
                         max(32 * 1024 * 1024, 2 * vmem_est)))

    cost = pl.CostEstimate(
        flops=2 * M_pad * K * E,
        transcendentals=M_pad,               # one rsqrt per row
        bytes_accessed=(M_pad * K * in_bytes
                        + K * E * in_bytes
                        + 8 * E * 4
                        + M_pad * E * out_bytes),
    )

    out = pl.pallas_call(
        _patch_embed_kernel,
        out_shape=jax.ShapeDtypeStruct((M_pad, E), out_dtype),
        grid_spec=pltpu.PrefetchScalarGridSpec(
            num_scalar_prefetch=0,
            grid=grid,
            in_specs=[
                pl.BlockSpec((tm, K), lambda i: (i, 0)),
                pl.BlockSpec((K, E), lambda i: (0, 0)),
                pl.BlockSpec((8, E), lambda i: (0, 0)),
            ],
            out_specs=pl.BlockSpec((tm, E), lambda i: (i, 0)),
        ),
        compiler_params=pltpu.CompilerParams(
            dimension_semantics=("parallel",),
            vmem_limit_bytes=vmem_limit,
            # Let XLA fuse the cast+transpose producer into the patch-input DMA.
            allow_input_fusion=[True, False, False],
        ),
        cost_estimate=cost,
    )(xp, wmat, params)

    if M_pad != M:
        out = out[:M]
    return out.reshape(B, N, E)


def patch_embed_forward(x, w, b, gamma, beta, patch_size,
                        *, compute_dtype=jnp.bfloat16, out_dtype=None,
                        tm_target=1024):
    """x: (B, C, H, W); w: (E, C, ph, pw); b, gamma, beta: (E,).

    out_dtype=None keeps x.dtype (torch semantics).  Pass jnp.bfloat16 to halve
    output HBM traffic when the result feeds a bf16 transformer stack.
    """
    ph, pw = patch_size
    B, C, H, W = x.shape
    Hp, Wp = H // ph, W // pw
    od = jnp.dtype(x.dtype if out_dtype is None else out_dtype)
    out = _patch_embed_impl(x, w, b, gamma, beta,
                            patch_size=(ph, pw),
                            compute_dtype=jnp.dtype(compute_dtype),
                            out_dtype=od,
                            tm_target=int(tm_target))
    return out, (Hp, Wp)


def _ref_forward(x, w, b, gamma, beta, patch_size, compute_dtype=jnp.float32):
    # pure-JAX reference (conv via the same patch trick; LN / accumulation in f32)
    B, C, H, W = x.shape
    E = w.shape[0]
    ph, pw = patch_size
    Hp, Wp = H // ph, W // pw
    xp = x.astype(compute_dtype).reshape(B, C, Hp, ph, Wp, pw)
    xp = jnp.transpose(xp, (0, 2, 4, 1, 3, 5)).reshape(B, Hp * Wp, C * ph * pw)
    wmat = w.reshape(E, -1).T.astype(compute_dtype)
    y = jnp.dot(xp, wmat, preferred_element_type=jnp.float32) + b
    mean = jnp.mean(y, axis=-1, keepdims=True)
    var = jnp.mean((y - mean) ** 2, axis=-1, keepdims=True)
    yn = (y - mean) * jax.lax.rsqrt(var + LN_EPS) * gamma + beta
    return yn, (Hp, Wp)


if __name__ == "__main__":
    # small shapes consistent with the module
    B, C, IMG, PATCH, EMBED = 2, 4, 16, 4, 32

    key = jax.random.PRNGKey(0)
    kx, kw, kb, kg = jax.random.split(key, 4)
    x = jax.random.normal(kx, (B, C, IMG, IMG), dtype=jnp.float32)

    # deterministic synthetic parameters (shapes from Conv2d / LayerNorm init)
    w = jax.random.normal(kw, (EMBED, C, PATCH, PATCH), dtype=jnp.float32) * 0.02
    b = jax.random.normal(kb, (EMBED,), dtype=jnp.float32) * 0.02
    gamma = jnp.ones((EMBED,), dtype=jnp.float32)
    beta = jnp.zeros((EMBED,), dtype=jnp.float32)

    out, (Hp, Wp) = patch_embed_forward(x, w, b, gamma, beta, (PATCH, PATCH))
    out = jax.block_until_ready(out)

    assert out.shape == (B, (IMG // PATCH) ** 2, EMBED)
    assert out.dtype == x.dtype
    assert (Hp, Wp) == (IMG // PATCH, IMG // PATCH)

    # tight check vs matched-precision (bf16 streaming, f32 accumulate/LN) reference
    ref_bf16, _ = _ref_forward(x, w, b, gamma, beta, (PATCH, PATCH),
                               compute_dtype=jnp.bfloat16)
    assert jnp.allclose(out, ref_bf16, atol=1e-4, rtol=1e-4)

    # looser sanity check vs full-fp32 (torch-equivalent) reference
    ref_f32, _ = _ref_forward(x, w, b, gamma, beta, (PATCH, PATCH),
                              compute_dtype=jnp.float32)
    assert jnp.allclose(out, ref_f32, atol=5e-2, rtol=5e-2)

    print("KERNEL_OK")
</pallas_src>

<mosaic_0001>
module attributes {stable_mosaic.version = 11 : i64} {
  func.func @_patch_embed_kernel(%arg0: i32, %arg1: memref<16x64xbf16, #tpu.memory_space<vmem>>, %arg2: memref<64x32xbf16, #tpu.memory_space<vmem>>, %arg3: memref<8x32xf32, #tpu.memory_space<vmem>>, %arg4: memref<16x32xf32, #tpu.memory_space<vmem>>) attributes {dimension_semantics = [#tpu.dimension_semantics<parallel>], iteration_bounds = array<i64: 2>, scalar_prefetch = 0 : i64, scratch_operands = 0 : i64, tpu.core_type = #tpu.core_type<tc>, window_params = [{transform_indices = @transform_0, window_bounds = array<i64: 16, 64>}, {pipeline_mode = #tpu.pipeline_mode<synchronous>, transform_indices = @transform_1, window_bounds = array<i64: 64, 32>}, {pipeline_mode = #tpu.pipeline_mode<synchronous>, transform_indices = @transform_2, window_bounds = array<i64: 8, 32>}, {transform_indices = @transform_3, window_bounds = array<i64: 16, 32>}]} {
    %c0 = arith.constant 0 : index
    %c0_0 = arith.constant 0 : index
    %0 = vector.load %arg1[%c0, %c0_0] : memref<16x64xbf16, #tpu.memory_space<vmem>>, vector<16x64xbf16>
    %c0_1 = arith.constant 0 : index
    %c0_2 = arith.constant 0 : index
    %1 = vector.load %arg2[%c0_1, %c0_2] : memref<64x32xbf16, #tpu.memory_space<vmem>>, vector<64x32xbf16>
    %cst = arith.constant dense<0.000000e+00> : vector<16x32xf32>
    %2 = tpu.matmul %0, %1, %cst {dimension_numbers = #tpu.dot_dimension_numbers<[1], [0], [0], [1], [0, 0, 1, 1], [], []>} : vector<16x64xbf16>, vector<64x32xbf16>, vector<16x32xf32> -> vector<16x32xf32>
    %c0_3 = arith.constant 0 : index
    %c0_4 = arith.constant 0 : index
    %3 = vector.load %arg3[%c0_3, %c0_4] : memref<8x32xf32, #tpu.memory_space<vmem>>, vector<8x32xf32>
    %4 = vector.extract_strided_slice %3 {offsets = [0, 0], sizes = [1, 32], strides = [1, 1]} : vector<8x32xf32> to vector<1x32xf32>
    %5 = vector.extract_strided_slice %3 {offsets = [1, 0], sizes = [1, 32], strides = [1, 1]} : vector<8x32xf32> to vector<1x32xf32>
    %6 = vector.extract_strided_slice %3 {offsets = [2, 0], sizes = [1, 32], strides = [1, 1]} : vector<8x32xf32> to vector<1x32xf32>
    %7 = vector.broadcast %4 : vector<1x32xf32> to vector<16x32xf32>
    %8 = arith.addf %2, %7 : vector<16x32xf32>
    %cst_5 = arith.constant dense<0.000000e+00> : vector<16xf32>
    %9 = vector.multi_reduction <add>, %8, %cst_5 [1] : vector<16x32xf32> to vector<16xf32>
    %10 = vector.shape_cast %9 : vector<16xf32> to vector<16x1xf32>
    %cst_6 = arith.constant 3.200000e+01 : f32
    %11 = vector.broadcast %cst_6 : f32 to vector<16x1xf32>
    %12 = arith.divf %10, %11 : vector<16x1xf32>
    %13 = vector.broadcast %12 : vector<16x1xf32> to vector<16x32xf32>
    %14 = arith.subf %8, %13 : vector<16x32xf32>
    %15 = arith.mulf %14, %14 : vector<16x32xf32>
    %cst_7 = arith.constant dense<0.000000e+00> : vector<16xf32>
    %16 = vector.multi_reduction <add>, %15, %cst_7 [1] : vector<16x32xf32> to vector<16xf32>
    %17 = vector.shape_cast %16 : vector<16xf32> to vector<16x1xf32>
    %cst_8 = arith.constant 3.200000e+01 : f32
    %18 = vector.broadcast %cst_8 : f32 to vector<16x1xf32>
    %19 = arith.divf %17, %18 : vector<16x1xf32>
    %cst_9 = arith.constant 9.99999974E-6 : f32
    %20 = vector.broadcast %cst_9 : f32 to vector<16x1xf32>
    %21 = arith.addf %19, %20 : vector<16x1xf32>
    %22 = math.rsqrt %21 : vector<16x1xf32>
    %23 = vector.broadcast %22 : vector<16x1xf32> to vector<16x32xf32>
    %24 = arith.mulf %14, %23 : vector<16x32xf32>
    %25 = vector.broadcast %5 : vector<1x32xf32> to vector<16x32xf32>
    %26 = arith.mulf %24, %25 : vector<16x32xf32>
    %27 = vector.broadcast %6 : vector<1x32xf32> to vector<16x32xf32>
    %28 = arith.addf %26, %27 : vector<16x32xf32>
    %c0_10 = arith.constant 0 : index
    %c0_11 = arith.constant 0 : index
    %29 = vector.load %arg4[%c0_10, %c0_11] : memref<16x32xf32, #tpu.memory_space<vmem>>, vector<16x32xf32>
    tpu.vector_store %arg4[%c0_10, %c0_11], %28 {strides = array<i32>} : memref<16x32xf32, #tpu.memory_space<vmem>>, vector<16x32xf32>,
    return
  }
  func.func @transform_0(%arg0: i32) -> (i32, i32) {
    %c0_i32 = arith.constant 0 : i32
    %c0_i32_0 = arith.constant 0 : i32
    return %arg0, %c0_i32 : i32, i32
  }
  func.func @transform_1(%arg0: i32) -> (i32, i32) {
    %c0_i32 = arith.constant 0 : i32
    %c0_i32_0 = arith.constant 0 : i32
    %c0_i32_1 = arith.constant 0 : i32
    return %c0_i32, %c0_i32_0 : i32, i32
  }
  func.func @transform_2(%arg0: i32) -> (i32, i32) {
    %c0_i32 = arith.constant 0 : i32
    %c0_i32_0 = arith.constant 0 : i32
    %c0_i32_1 = arith.constant 0 : i32
    return %c0_i32, %c0_i32_0 : i32, i32
  }
  func.func @transform_3(%arg0: i32) -> (i32, i32) {
    %c0_i32 = arith.constant 0 : i32
    %c0_i32_0 = arith.constant 0 : i32
    return %arg0, %c0_i32 : i32, i32
  }
}

</mosaic_0001>

<llo_original>
// kernel: _patch_embed_impl.1
$region0: #{_patch_embed_impl.1}
  #allocation0 [shape = 'u32[]', space=smem, size = 0x4, offset = 0x4, fixed_abs, tag = 'smem constant byte address 0x4 - core index']
  #allocation1 [shape = 'u32[144,128]{1,0:T(1,128)}', space=vmem, size = 0x12000, scoped, tag = 'internal scratch']
  %s0 = inlined_call_operand.vmem [shape: bf16[32,64], index: 0, kind: input, shape index: {}]
  %s1 = inlined_call_operand.vmem [shape: bf16[64,32], index: 1, kind: input, shape index: {}]
  %s2 = inlined_call_operand.vmem [shape: f32[8,32], index: 2, kind: input, shape index: {}]
  %s3 = inlined_call_operand.hbm [shape: f32[32,32], index: 3, kind: output, shape index: {}]
  %s4 = sld [smem:[#allocation0]]
  $region45: #{_patch_embed_impl.1} parent=0
    _
  %s6 = ssub.s32 1, %s4
  %s7 = scalar_select 0, %s6, %s4
  $region1: #{_patch_embed_impl.1} parent=0
    #allocation2 [shape = 'u8[16384]{0}', space=vmem, size = 0x4000, scoped, tag = 'output window, operand 0']
    #allocation3 [shape = 's32[2]{0}', space=sflag, size = 0x8, scoped, tag = 'scoped memory for _patch_embed_impl.1']
    %8 = vsyncpa [#allocation3], 0
    %s9 = scalar_lea.sflag [#allocation3], 1
    %10 = vsyncpa %s9, 0
    loop: start=0, step=1, limit=4
    $region2: #{_patch_embed_impl.1} parent=1 // loop_pre_header
      _
    $region3: #{_patch_embed_impl.1} parent=1 // loop_header
      %s12 = sphi 0, %s16
      %p13 = scmp.ge.s32.totalorder %s12, 4
      %s22 = sphi 0, %s24
      %s25 = sphi 0, %s22
      %s26 = sphi 0, %s25
      %s42 = sphi 0, %s26
      %s46 = sphi 0, %s46
      %s48 = sphi 0, %s46
      %s49 = sphi 0, %s48
      %s63 = sphi 0, %s49
      %s67 = sphi 0, %s67
      %s69 = sphi 0, %s67
      %s70 = sphi 0, %s69
      %s84 = sphi 0, %s70
      %s90 = sphi 0, %s92
      %s93 = sphi 0, %s90
      %s94 = sphi 0, %s93
      %s110 = sphi 0, %s94
    $region4: #{_patch_embed_impl.1} parent=1 // loop_header_branch
      %15 = sbr.rel (%p13) target = $region8
    $region5: #{_patch_embed_impl.1} parent=1 // loop_body
      %s17 = ssub.s32 %s12, 1
      %s18 = ssub.s32 %s12, 2
      %s19 = sadd.s32 %s12, 1
      %s20 = ssub.s32 %s12, %s19
      %p21 = scmp.eq.s32.totalorder %s20, 0
      %s23 = sadd.s32 %s22, 1
      %s24 = scalar_select %p21, %s22, %s23
      %p27 = pneg %p21
      %p28 = scmp.eq.s32.totalorder %s12, 1
      %p29 = por %p27, %p28
      %p30 = scmp.ne.s32.totalorder %s22, %s25
      %p31 = scmp.eq.s32.totalorder %s12, 0
      %p32 = por %p30, %p31
      %p33 = scmp.ne.s32.totalorder %s22, %s25
      %p34 = scmp.eq.s32.totalorder %s17, 1
      %p35 = por %p33, %p34
      %p36 = scmp.ne.s32.totalorder %s25, %s26
      %p37 = scmp.eq.s32.totalorder %s17, 0
      %p38 = por %p36, %p37
      %p39 = scmp.ne.s32.totalorder %s25, %s26
      %p40 = scmp.eq.s32.totalorder %s18, 1
      %p41 = por %p39, %p40
      %p43 = scmp.ne.s32.totalorder %s26, %s42
      %p44 = scmp.eq.s32.totalorder %s18, 0
      %p45 = por %p43, %p44
      %s47 = sadd.s32 %s46, 1
      %p50 = scmp.eq.s32.totalorder %s12, 1
      %p51 = scmp.ne.s32.totalorder %s46, %s48
      %p52 = scmp.eq.s32.totalorder %s12, 0
      %p53 = por %p51, %p52
      %p54 = scmp.ne.s32.totalorder %s46, %s48
      %p55 = scmp.eq.s32.totalorder %s17, 1
      %p56 = por %p54, %p55
      %p57 = scmp.ne.s32.totalorder %s48, %s49
      %p58 = scmp.eq.s32.totalorder %s17, 0
      %p59 = por %p57, %p58
      %p60 = scmp.ne.s32.totalorder %s48, %s49
      %p61 = scmp.eq.s32.totalorder %s18, 1
      %p62 = por %p60, %p61
      %p64 = scmp.ne.s32.totalorder %s49, %s63
      %p65 = scmp.eq.s32.totalorder %s18, 0
      %p66 = por %p64, %p65
      %s68 = sadd.s32 %s67, 1
      %p71 = scmp.eq.s32.totalorder %s12, 1
      %p72 = scmp.ne.s32.totalorder %s67, %s69
      %p73 = scmp.eq.s32.totalorder %s12, 0
      %p74 = por %p72, %p73
      %p75 = scmp.ne.s32.totalorder %s67, %s69
      %p76 = scmp.eq.s32.totalorder %s17, 1
      %p77 = por %p75, %p76
      %p78 = scmp.ne.s32.totalorder %s69, %s70
      %p79 = scmp.eq.s32.totalorder %s17, 0
      %p80 = por %p78, %p79
      %p81 = scmp.ne.s32.totalorder %s69, %s70
      %p82 = scmp.eq.s32.totalorder %s18, 1
      %p83 = por %p81, %p82
      %p85 = scmp.ne.s32.totalorder %s70, %s84
      %p86 = scmp.eq.s32.totalorder %s18, 0
      %p87 = por %p85, %p86
      %s88 = ssub.s32 %s12, %s19
      %p89 = scmp.eq.s32.totalorder %s88, 0
      %s91 = sadd.s32 %s90, 1
      %s92 = scalar_select %p89, %s90, %s91
      %p95 = pneg %p89
      %p96 = scmp.eq.s32.totalorder %s12, 1
      %p97 = por %p95, %p96
      %p98 = scmp.ne.s32.totalorder %s90, %s93
      %p99 = scmp.eq.s32.totalorder %s12, 0
      %p100 = por %p98, %p99
      %p101 = scmp.ne.s32.totalorder %s90, %s93
      %p102 = scmp.eq.s32.totalorder %s17, 1
      %p103 = por %p101, %p102
      %p104 = scmp.ne.s32.totalorder %s93, %s94
      %p105 = scmp.eq.s32.totalorder %s17, 0
      %p106 = por %p104, %p105
      %p107 = scmp.ne.s32.totalorder %s93, %s94
      %p108 = scmp.eq.s32.totalorder %s18, 1
      %p109 = por %p107, %p108
      %p111 = scmp.ne.s32.totalorder %s94, %s110
      %p112 = scmp.eq.s32.totalorder %s18, 0
      %p113 = por %p111, %p112
      %p114 = scmp.le.s32.totalorder 1, %s12
      %p115 = scmp.lt.s32.totalorder %s12, 3
      %p116 = pnand %p114, %p115
      %p117 = pneg %p116
      // Predicated region
      $region9: #{_patch_embed_impl.1} parent=5 // pred_check
        _
      $region10: #{_patch_embed_impl.1} parent=5 // pred_check_branch
        %119 = sbr.rel (%p116) target = $region12
      $region11: #{_patch_embed_impl.1} parent=5 // pred_region
        %s120 = ssub.s32 %s12, 1
        // Predicated region
        $region13: #{_patch_embed_impl.1} parent=11 // pred_check
          %p121 = pneg %p59
        $region14: #{_patch_embed_impl.1} parent=11 // pred_check_branch
          %123 = sbr.rel (%p121) target = $region16
        $region15: #{_patch_embed_impl.1} parent=11 // pred_region
          _
        $region16: #{_patch_embed_impl.1} parent=11 // pred_fallthru
          _
        // Predicated region
        $region17: #{_patch_embed_impl.1} parent=11 // pred_check
          %p124 = pneg %p80
        $region18: #{_patch_embed_impl.1} parent=11 // pred_check_branch
          %126 = sbr.rel (%p124) target = $region20
        $region19: #{_patch_embed_impl.1} parent=11 // pred_region
          _
        $region20: #{_patch_embed_impl.1} parent=11 // pred_fallthru
          _
      $region12: #{_patch_embed_impl.1} parent=5 // pred_fallthru
        _
      %p127 = scmp.lt.s32.totalorder %s12, 2
      // Predicated region
      $region21: #{_patch_embed_impl.1} parent=5 // pred_check
        %p128 = pneg %p127
      $region22: #{_patch_embed_impl.1} parent=5 // pred_check_branch
        %130 = sbr.rel (%p128) target = $region24
      $region23: #{_patch_embed_impl.1} parent=5 // pred_region
        // Predicated region
        $region25: #{_patch_embed_impl.1} parent=23 // pred_check
          %p131 = pneg %p32
        $region26: #{_patch_embed_impl.1} parent=23 // pred_check_branch
          %133 = sbr.rel (%p131) target = $region28
        $region27: #{_patch_embed_impl.1} parent=23 // pred_region
          %s134 = smul.u32 2, %s12
          %p135 = scmp.lt.s32.totalorder %s134, 3
          %s136 = scalar_select %p135, %s134, 3
          %s137 = smul.addr %s136, 4
          %s138 = scalar_lea.vmem %s0, %s137
          %s139 = smul.u32 2, %s12
        $region28: #{_patch_embed_impl.1} parent=23 // pred_fallthru
          _
      $region24: #{_patch_embed_impl.1} parent=5 // pred_fallthru
        _
      %p140 = scmp.le.s32.totalorder 1, %s12
      %p141 = scmp.lt.s32.totalorder %s12, 3
      %p142 = pnand %p140, %p141
      %p143 = pneg %p142
      // Predicated region
      $region29: #{_patch_embed_impl.1} parent=5 // pred_check
        _
      $region30: #{_patch_embed_impl.1} parent=5 // pred_check_branch
        %145 = sbr.rel (%p142) target = $region32
      $region31: #{_patch_embed_impl.1} parent=5 // pred_region
        %s146 = ssub.s32 %s12, 1
        %s147 = smul.u32 2, %s17
        %p148 = scmp.lt.s32.totalorder %s147, 3
        %s149 = scalar_select %p148, %s147, 3
        %s150 = smul.addr %s149, 4
        %s151 = scalar_lea.vmem %s0, %s150
        %p152 = pneg %p38
        %p153 = pneg %p35
        %p154 = pneg %p59
        %p155 = pneg %p56
        %p156 = pneg %p80
        %p157 = pneg %p77
        %p158 = pneg %p106
        %p159 = pneg %p103
        %s160 = sand.u32 %s93, 1
        %s161 = scalar_lea.sflag [#allocation3], %s160
        %s162 = sand.u32 %s93, 1
        %s163 = smul.addr %s162, 16
        %s164 = scalar_lea.vmem [#allocation2], %s163
        %s165 = smul.u32 2, %s17
        %p166 = scmp.lt.s32.totalorder %s165, 3
        %s167 = scalar_select %p166, %s165, 3
        %s168 = smul.addr %s167, 4
        %s169 = scalar_lea.vmem %s0, %s168
        %s170 = smul.u32 2, %s17
        %s171 = smul.u32 2, %s17
        %v173 = vld [vmem:[%s169] sm:$0xf]
        %v174 = vld [vmem:[%s169 + $0x4] sm:$0xf]
        %v175 = vld [vmem:[%s1] sm:$0xf]
        %v176 = vld [vmem:[%s1 + $0x4] sm:$0xf]
        %v177 = vld [vmem:[%s1 + $0x8] sm:$0xf]
        %v178 = vld [vmem:[%s1 + $0xc] sm:$0xf]
        %v179 = vld [vmem:[%s1 + $0x10] sm:$0xf]
        %v180 = vld [vmem:[%s1 + $0x14] sm:$0xf]
        %v181 = vld [vmem:[%s1 + $0x18] sm:$0xf]
        %v182 = vld [vmem:[%s1 + $0x1c] sm:$0xf]
        %v183 = vld [vmem:[%s2] sm:$0xff]
        %v184 = vlaneseq
        %v185 = vshrl.u32 %v184, 7
        %v186 = vsub.s32 0, %v185
        %v187 = vrot.slane %v183, %v186
        %v190 = vunpack.c.l.b16 %v173
        %v191 = vunpack.c.l.b16 %v174
        %v192 = vpack.c.b16 %v191, %v190
        %v201 = vunpack.c.l.b16 %v175
        %v202 = vunpack.c.l.b16 %v176
        %v203 = vunpack.c.l.b16 %v177
        %v204 = vunpack.c.l.b16 %v178
        %v205 = vunpack.c.l.b16 %v179
        %v206 = vunpack.c.l.b16 %v180
        %v207 = vunpack.c.l.b16 %v181
        %v208 = vunpack.c.l.b16 %v182
        %v209 = vpack.c.b16 %v202, %v201
        %v210 = vpack.c.b16 %v204, %v203
        %v211 = vpack.c.b16 %v206, %v205
        %v212 = vpack.c.b16 %v208, %v207
        %vm217 = vcmask 523264
        %v219 = vsel %vm217, %v192, 0
        %221 = vmatprep.subr.bf16.mxu0 0
        %222 = vmatpush1.bf16.msra.mxu0 %v209
        %223 = vmatprep.subr.bf16.mxu0 0
        %224 = vmatpush1.bf16.msra.mxu0 %v210
        %225 = vmatprep.subr.bf16.mxu0 0
        %226 = vmatpush1.bf16.msra.mxu0 %v211
        %227 = vmatprep.subr.bf16.mxu0 0
        %228 = vmatpush1.bf16.msra.mxu0 %v212
        %229 = vmatprep.subr.bf16.mxu0 0
        %230 = vmatpush1.bf16.msra.mxu0 0
        %231 = vmatprep.subr.bf16.mxu0 0
        %232 = vmatpush1.bf16.msra.mxu0 0
        %233 = vmatprep.subr.bf16.mxu0 0
        %234 = vmatpush1.bf16.msra.mxu0 0
        %235 = vmatprep.subr.bf16.mxu0 0
        %236 = vmatpush1.bf16.msra.mxu0 0
        %237 = vmatprep.subr.bf16.mxu0 0
        %238 = vmatpush1.bf16.msra.mxu0 0
        %239 = vmatprep.subr.bf16.mxu0 0
        %240 = vmatpush1.bf16.msra.mxu0 0
        %241 = vmatprep.subr.bf16.mxu0 0
        %242 = vmatpush1.bf16.msra.mxu0 0
        %243 = vmatprep.subr.bf16.mxu0 0
        %244 = vmatpush1.bf16.msra.mxu0 0
        %245 = vmatprep.subr.bf16.mxu0 0
        %246 = vmatpush1.bf16.msra.mxu0 0
        %247 = vmatprep.subr.bf16.mxu0 0
        %248 = vmatpush1.bf16.msra.mxu0 0
        %249 = vmatprep.subr.bf16.mxu0 0
        %250 = vmatpush1.bf16.msra.mxu0 0
        %251 = vmatprep.subr.bf16.mxu0 0
        %252 = vmatpush1.bf16.msra.mxu0 0
        %253 = vmatprep.mubr.bf16.mxu0 0
        %254 = vmatmul.mubr.bf16.gmra.mrb[0].mxu0 %v219
        %v255 = vpop.f32.mrb[0].mxu0
        %v256 = vadd.f32 %v187, %v255
        %v257 = vpop.f32.mrb[0].mxu0
        %v258 = vpop.f32.mrb[0].mxu0
        %v259 = vadd.f32 %v187, %v258
        %v260 = vpop.f32.mrb[0].mxu0
        %261 = vdwg.mxu0
        %vm262 = vcmask 261120
        %v263 = vsel %vm262, %v256, 0.0
        %264 = vadd.xlane.f32.xlu0 %v263
        %v265 = vpop.xlane.xlu0 %264
        %v266 = vsel %vm262, %v259, 0.0
        %267 = vadd.xlane.f32.xlu0 %v266
        %v268 = vpop.xlane.xlu0 %267
        %v269 = vrcp.pop 32.0
        %v270 = vmul.f32 %v265, %v269
        %v271 = vmul.f32 %v268, %v269
        %v272 = vsub.f32 %v256, %v270
        %v273 = vsub.f32 %v259, %v271
        %v274 = vmul.f32 %v272, %v272
        %v275 = vmul.f32 %v273, %v273
        %v276 = vsel %vm262, %v274, 0.0
        %277 = vadd.xlane.f32.xlu0 %v276
        %v278 = vpop.xlane.xlu0 %277
        %v279 = vsel %vm262, %v275, 0.0
        %280 = vadd.xlane.f32.xlu0 %v279
        %v281 = vpop.xlane.xlu0 %280
        %v282 = vmul.f32 %v278, %v269
        %v283 = vmul.f32 %v281, %v269
        %v284 = vadd.f32 %v282, 1e-05
        %v285 = vadd.f32 %v283, 1e-05
        %v286 = vrsqrt.pop %v284
        %v287 = vrsqrt.pop %v285
        %v288 = vmul.f32 %v272, %v286
        %v289 = vmul.f32 %v273, %v287
        %v290 = vlaneseq
        %v291 = vshrl.u32 %v290, 7
        %v292 = vsub.s32 1, %v291
        %v293 = vrot.slane %v183, %v292
        %v294 = vmul.f32 %v288, %v293
        %v295 = vmul.f32 %v289, %v293
        %v296 = vlaneseq
        %v297 = vshrl.u32 %v296, 7
        %v298 = vsub.s32 2, %v297
        %v299 = vrot.slane %v183, %v298
        %v300 = vadd.f32 %v294, %v299
        %v301 = vadd.f32 %v295, %v299
        %302 = vst.msk [vmem:[%s164] sm:$0xff] %vm262, %v300
        %303 = vst.msk [vmem:[%s164 + $0x8] sm:$0xff] %vm262, %v301
        %s304 = sand.u32 %s93, 1
        %s305 = scalar_lea.sflag [#allocation3], %s304
        %s306 = sand.u32 %s93, 1
        %s307 = smul.addr %s306, 16
        %s308 = scalar_lea.vmem [#allocation2], %s307
        // Predicated region
        $region33: #{_patch_embed_impl.1} parent=31 // pred_check
          %p309 = pneg %p103
        $region34: #{_patch_embed_impl.1} parent=31 // pred_check_branch
          %311 = sbr.rel (%p309) target = $region36
        $region35: #{_patch_embed_impl.1} parent=31 // pred_region
          %s312 = smul.u32 2, %s17
          %s314 = ssub.s32 256, 256
          %315 = vsyncadd %s305, %s314
          %s316 = smul.addr %s312, 128
          %s317 = scalar_lea.hbm %s3, %s316
          %s318 = sshll.u32 %s308, 4
          %s319 = int_to_ptr.vmem [resolvable:$true] %s318
          %324 = dma.vmem_to_hbm [thread:$0]  %s319, 256, %s317, %s305, 128, 128, 8
        $region36: #{_patch_embed_impl.1} parent=31 // pred_fallthru
          _
      $region32: #{_patch_embed_impl.1} parent=5 // pred_fallthru
        _
      %p325 = scmp.le.s32.totalorder 2, %s12
      // Predicated region
      $region37: #{_patch_embed_impl.1} parent=5 // pred_check
        %p326 = pneg %p325
      $region38: #{_patch_embed_impl.1} parent=5 // pred_check_branch
        %328 = sbr.rel (%p326) target = $region40
      $region39: #{_patch_embed_impl.1} parent=5 // pred_region
        %s329 = ssub.s32 %s12, 2
        // Predicated region
        $region41: #{_patch_embed_impl.1} parent=39 // pred_check
          %p330 = pneg %p109
        $region42: #{_patch_embed_impl.1} parent=39 // pred_check_branch
          %332 = sbr.rel (%p330) target = $region44
        $region43: #{_patch_embed_impl.1} parent=39 // pred_region
          %s333 = sand.u32 %s94, 1
          %s334 = scalar_lea.sflag [#allocation3], %s333
          %s335 = sand.u32 %s94, 1
          %s336 = smul.addr %s335, 16
          %s337 = scalar_lea.vmem [#allocation2], %s336
          %338 = dma.done %s334, 256
        $region44: #{_patch_embed_impl.1} parent=39 // pred_fallthru
          _
      $region40: #{_patch_embed_impl.1} parent=5 // pred_fallthru
        _
    $region6: #{_patch_embed_impl.1} parent=1 // loop_footer
      %s16 = sadd.s32 1, %s12
    $region7: #{_patch_embed_impl.1} parent=1 // loop_footer_branch
      %11 = sbr.rel target = $region3
    $region8: #{_patch_embed_impl.1} parent=1 // loop_exit
      _
    %339 = vsyncpa [#allocation3], 1
    %s340 = scalar_lea.sflag [#allocation3], 1
    %341 = vsyncpa %s340, 1

</llo_original>
